<compile_context>
chip_gen: v5e
topology: v5e:2x2
jax: 0.10.0
libtpu: 0.0.40
codegen_flags: <defaults>
</compile_context>

<pallas_src>
import jax
import jax.numpy as jnp
from jax.experimental import pallas as pl
from jax.experimental.pallas import tpu as pltpu

# ---- hyper-parameters (small, consistent with the module) ----
N_CLS = 2                  # number of class names
N_VAR = 4                  # hard-coded "4" context variants in the module
N_CTX = 4                  # cfg.TRAINER.VLPL.N_CTX
DIM = 128                  # ctx_dim (ln_final width); kept lane-dense
SUF_LEN = 3                # tokens after the context (classname + '.' + padding)
L = 1 + N_CTX + SUF_LEN    # total prompt length (= 8)


# --------------------------------------------------------------------------
# Pallas kernel: build all N_VAR prompt variants for one class
# --------------------------------------------------------------------------
def _prompt_kernel(prefix_ref, ctx_ref, suffix_ref, out_ref):
    # prefix_ref : (1, DIM)            -- this class's SOS embedding
    # ctx_ref    : (N_VAR, N_CTX, DIM) -- shared learnable context (resident)
    # suffix_ref : (SUF_LEN, DIM)      -- this class's suffix embeddings
    # out_ref    : (N_VAR, L, DIM)
    pre = jnp.broadcast_to(prefix_ref[...][None, :, :], (N_VAR, 1, DIM))
    suf = jnp.broadcast_to(suffix_ref[...][None, :, :], (N_VAR, SUF_LEN, DIM))
    prompts = jnp.concatenate([pre, ctx_ref[...], suf], axis=1)   # (N_VAR, L, DIM)
    out_ref[...] = prompts.astype(out_ref.dtype)                  # one full-tile store


def prompt_learner_forward(ctx, token_prefix, token_suffix):
    """ctx: (N_VAR, N_CTX, DIM); token_prefix: (N_CLS, 1, DIM);
    token_suffix: (N_CLS, SUF_LEN, DIM)  ->  prompts: (N_CLS, N_VAR, L, DIM)."""
    n_cls = token_prefix.shape[0]
    return pl.pallas_call(
        _prompt_kernel,
        out_shape=jax.ShapeDtypeStruct((n_cls, N_VAR, L, DIM), ctx.dtype),
        grid_spec=pl.GridSpec(
            grid=(n_cls,),
            in_specs=[
                pl.BlockSpec((None, 1, DIM), lambda c: (c, 0, 0)),        # prefix[c]
                pl.BlockSpec((N_VAR, N_CTX, DIM), lambda c: (0, 0, 0)),   # ctx (shared)
                pl.BlockSpec((None, SUF_LEN, DIM), lambda c: (c, 0, 0)),  # suffix[c]
            ],
            out_specs=pl.BlockSpec((None, N_VAR, L, DIM),
                                   lambda c: (c, 0, 0, 0))),
        compiler_params=pltpu.CompilerParams(
            dimension_semantics=("parallel",)),   # classes independent -> 2 TCs on v7x
    )(token_prefix, ctx, token_suffix)


# --------------------------------------------------------------------------
# Pure-JAX reference (mirrors the PyTorch forward exactly)
# --------------------------------------------------------------------------
def reference_forward(ctx, token_prefix, token_suffix):
    n_cls = token_prefix.shape[0]
    ctx_e = jnp.broadcast_to(ctx[None], (n_cls, N_VAR, N_CTX, DIM))
    pre_e = jnp.broadcast_to(token_prefix[:, None], (n_cls, N_VAR, 1, DIM))
    suf_e = jnp.broadcast_to(token_suffix[:, None], (n_cls, N_VAR, SUF_LEN, DIM))
    return jnp.concatenate([pre_e, ctx_e, suf_e], axis=2)


if __name__ == "__main__":
    key = jax.random.PRNGKey(0)
    k_ctx, k_pre, k_suf = jax.random.split(key, 3)

    # learnable context: nn.init.normal_(std=0.02)
    ctx = 0.02 * jax.random.normal(k_ctx, (N_VAR, N_CTX, DIM), jnp.float32)
    # frozen token-embedding buffers (synthetic stand-ins for CLIP embeddings)
    # TODO(synk): clip.tokenize + clip_model.token_embedding (init-time, CPU) are
    # not translated; prefix/suffix buffers are synthesized deterministically.
    token_prefix = 0.05 * jax.random.normal(k_pre, (N_CLS, 1, DIM), jnp.float32)
    token_suffix = 0.05 * jax.random.normal(k_suf, (N_CLS, SUF_LEN, DIM), jnp.float32)

    out = prompt_learner_forward(ctx, token_prefix, token_suffix)
    out = jax.block_until_ready(out)

    ref = reference_forward(ctx, token_prefix, token_suffix)
    assert out.shape == (N_CLS, N_VAR, L, DIM), out.shape
    assert bool(jnp.all(jnp.isfinite(out)))
    assert bool(jnp.allclose(out, ref, atol=1e-6, rtol=1e-6))
    print("KERNEL_OK")
</pallas_src>

<mosaic_0001>
module attributes {stable_mosaic.version = 11 : i64} {
  func.func @_prompt_kernel(%arg0: i32, %arg1: memref<1x1x128xf32, #tpu.memory_space<vmem>>, %arg2: memref<4x4x128xf32, #tpu.memory_space<vmem>>, %arg3: memref<1x3x128xf32, #tpu.memory_space<vmem>>, %arg4: memref<1x4x8x128xf32, #tpu.memory_space<vmem>>) attributes {dimension_semantics = [#tpu.dimension_semantics<parallel>], iteration_bounds = array<i64: 2>, scalar_prefetch = 0 : i64, scratch_operands = 0 : i64, tpu.core_type = #tpu.core_type<tc>, window_params = [{transform_indices = @transform_0, window_bounds = array<i64: 1, 1, 128>}, {pipeline_mode = #tpu.pipeline_mode<synchronous>, transform_indices = @transform_1, window_bounds = array<i64: 4, 4, 128>}, {transform_indices = @transform_2, window_bounds = array<i64: 1, 3, 128>}, {transform_indices = @transform_3, window_bounds = array<i64: 1, 4, 8, 128>}]} {
    %c0 = arith.constant 0 : index
    %c0_0 = arith.constant 0 : index
    %c0_1 = arith.constant 0 : index
    %0 = vector.load %arg1[%c0, %c0_0, %c0_1] : memref<1x1x128xf32, #tpu.memory_space<vmem>>, vector<1x1x128xf32>
    %1 = vector.shape_cast %0 : vector<1x1x128xf32> to vector<1x128xf32>
    %2 = vector.shape_cast %1 : vector<1x128xf32> to vector<1x1x128xf32>
    %3 = vector.shape_cast %2 : vector<1x1x128xf32> to vector<1x1x128xf32>
    %4 = vector.broadcast %3 : vector<1x1x128xf32> to vector<4x1x128xf32>
    %c0_2 = arith.constant 0 : index
    %c0_3 = arith.constant 0 : index
    %c0_4 = arith.constant 0 : index
    %5 = vector.load %arg3[%c0_2, %c0_3, %c0_4] : memref<1x3x128xf32, #tpu.memory_space<vmem>>, vector<1x3x128xf32>
    %6 = vector.shape_cast %5 : vector<1x3x128xf32> to vector<3x128xf32>
    %7 = vector.shape_cast %6 : vector<3x128xf32> to vector<1x3x128xf32>
    %8 = vector.shape_cast %7 : vector<1x3x128xf32> to vector<1x3x128xf32>
    %9 = vector.broadcast %8 : vector<1x3x128xf32> to vector<4x3x128xf32>
    %c0_5 = arith.constant 0 : index
    %c0_6 = arith.constant 0 : index
    %c0_7 = arith.constant 0 : index
    %10 = vector.load %arg2[%c0_5, %c0_6, %c0_7] : memref<4x4x128xf32, #tpu.memory_space<vmem>>, vector<4x4x128xf32>
    %11 = tpu.concatenate %4, %10, %9 in 1 : vector<4x1x128xf32>, vector<4x4x128xf32>, vector<4x3x128xf32> -> vector<4x8x128xf32>
    %c0_8 = arith.constant 0 : index
    %c0_9 = arith.constant 0 : index
    %c0_10 = arith.constant 0 : index
    %c0_11 = arith.constant 0 : index
    %12 = vector.load %arg4[%c0_8, %c0_9, %c0_10, %c0_11] : memref<1x4x8x128xf32, #tpu.memory_space<vmem>>, vector<1x4x8x128xf32>
    %13 = vector.shape_cast %12 : vector<1x4x8x128xf32> to vector<4x8x128xf32>
    %14 = vector.shape_cast %11 : vector<4x8x128xf32> to vector<1x4x8x128xf32>
    tpu.vector_store %arg4[%c0_8, %c0_9, %c0_10, %c0_11], %14 {strides = array<i32>} : memref<1x4x8x128xf32, #tpu.memory_space<vmem>>, vector<1x4x8x128xf32>,
    return
  }
  func.func @transform_0(%arg0: i32) -> (i32, i32, i32) {
    %c0_i32 = arith.constant 0 : i32
    %c0_i32_0 = arith.constant 0 : i32
    %c0_i32_1 = arith.constant 0 : i32
    return %arg0, %c0_i32, %c0_i32_0 : i32, i32, i32
  }
  func.func @transform_1(%arg0: i32) -> (i32, i32, i32) {
    %c0_i32 = arith.constant 0 : i32
    %c0_i32_0 = arith.constant 0 : i32
    %c0_i32_1 = arith.constant 0 : i32
    %c0_i32_2 = arith.constant 0 : i32
    return %c0_i32, %c0_i32_0, %c0_i32_1 : i32, i32, i32
  }
  func.func @transform_2(%arg0: i32) -> (i32, i32, i32) {
    %c0_i32 = arith.constant 0 : i32
    %c0_i32_0 = arith.constant 0 : i32
    %c0_i32_1 = arith.constant 0 : i32
    return %arg0, %c0_i32, %c0_i32_0 : i32, i32, i32
  }
  func.func @transform_3(%arg0: i32) -> (i32, i32, i32, i32) {
    %c0_i32 = arith.constant 0 : i32
    %c0_i32_0 = arith.constant 0 : i32
    %c0_i32_1 = arith.constant 0 : i32
    %c0_i32_2 = arith.constant 0 : i32
    return %arg0, %c0_i32, %c0_i32_0, %c0_i32_1 : i32, i32, i32, i32
  }
}

</mosaic_0001>

<llo_original>
// kernel: tpu_custom_call.1
$region0: #{tpu_custom_call.1}
  #allocation0 [shape = 'u32[]', space=smem, size = 0x4, offset = 0x4, fixed_abs, tag = 'smem constant byte address 0x4 - core index']
  #allocation1 [shape = 'u32[72,128]{1,0:T(1,128)}', space=vmem, size = 0x9000, scoped, tag = 'internal scratch']
  %s0 = inlined_call_operand.vmem [shape: f32[2,1,128], index: 0, kind: input, shape index: {}]
  %s1 = inlined_call_operand.hbm [shape: f32[4,4,128], index: 1, kind: input, shape index: {}]
  %s2 = inlined_call_operand.vmem [shape: f32[2,3,128], index: 2, kind: input, shape index: {}]
  %s3 = inlined_call_operand.hbm [shape: f32[2,4,8,128], index: 3, kind: output, shape index: {}]
  %s4 = sld [smem:[#allocation0]]
  $region49: #{tpu_custom_call.1} parent=0
    _
  %s6 = ssub.s32 1, %s4
  %s7 = scalar_select 0, %s6, %s4
  $region1: #{tpu_custom_call.1} parent=0
    #allocation2 [shape = 'u8[8192]{0}', space=vmem, size = 0x2000, scoped, tag = 'input window, operand 1, single buffered']
    #allocation3 [shape = 's32[2]{0}', space=sflag, size = 0x8, scoped, tag = 'scoped memory for tpu_custom_call.1']
    #allocation4 [shape = 's32[2]{0}', space=sflag, size = 0x8, scoped, tag = 'scoped memory for tpu_custom_call.1']
    #allocation5 [shape = 'u8[32768]{0}', space=vmem, size = 0x8000, scoped, tag = 'output window, operand 0']
    %8 = vsyncpa [#allocation3], 0
    %9 = vsyncpa [#allocation4], 0
    %s10 = scalar_lea.sflag [#allocation4], 1
    %11 = vsyncpa %s10, 0
    loop: start=0, step=1, limit=4
    $region2: #{tpu_custom_call.1} parent=1 // loop_pre_header
      _
    $region3: #{tpu_custom_call.1} parent=1 // loop_header
      %s13 = sphi 0, %s17
      %p14 = scmp.ge.s32.totalorder %s13, 4
      %s23 = sphi 0, %s25
      %s26 = sphi 0, %s23
      %s27 = sphi 0, %s26
      %s43 = sphi 0, %s27
      %s47 = sphi 0, %s47
      %s49 = sphi 0, %s47
      %s50 = sphi 0, %s49
      %s64 = sphi 0, %s50
      %s70 = sphi 0, %s72
      %s73 = sphi 0, %s70
      %s74 = sphi 0, %s73
      %s90 = sphi 0, %s74
      %s96 = sphi 0, %s98
      %s99 = sphi 0, %s96
      %s100 = sphi 0, %s99
      %s116 = sphi 0, %s100
    $region4: #{tpu_custom_call.1} parent=1 // loop_header_branch
      %16 = sbr.rel (%p14) target = $region8
    $region5: #{tpu_custom_call.1} parent=1 // loop_body
      %s18 = ssub.s32 %s13, 1
      %s19 = ssub.s32 %s13, 2
      %s20 = sadd.s32 %s13, 1
      %s21 = ssub.s32 %s13, %s20
      %p22 = scmp.eq.s32.totalorder %s21, 0
      %s24 = sadd.s32 %s23, 1
      %s25 = scalar_select %p22, %s23, %s24
      %p28 = pneg %p22
      %p29 = scmp.eq.s32.totalorder %s13, 1
      %p30 = por %p28, %p29
      %p31 = scmp.ne.s32.totalorder %s23, %s26
      %p32 = scmp.eq.s32.totalorder %s13, 0
      %p33 = por %p31, %p32
      %p34 = scmp.ne.s32.totalorder %s23, %s26
      %p35 = scmp.eq.s32.totalorder %s18, 1
      %p36 = por %p34, %p35
      %p37 = scmp.ne.s32.totalorder %s26, %s27
      %p38 = scmp.eq.s32.totalorder %s18, 0
      %p39 = por %p37, %p38
      %p40 = scmp.ne.s32.totalorder %s26, %s27
      %p41 = scmp.eq.s32.totalorder %s19, 1
      %p42 = por %p40, %p41
      %p44 = scmp.ne.s32.totalorder %s27, %s43
      %p45 = scmp.eq.s32.totalorder %s19, 0
      %p46 = por %p44, %p45
      %s48 = sadd.s32 %s47, 1
      %p51 = scmp.eq.s32.totalorder %s13, 1
      %p52 = scmp.ne.s32.totalorder %s47, %s49
      %p53 = scmp.eq.s32.totalorder %s13, 0
      %p54 = por %p52, %p53
      %p55 = scmp.ne.s32.totalorder %s47, %s49
      %p56 = scmp.eq.s32.totalorder %s18, 1
      %p57 = por %p55, %p56
      %p58 = scmp.ne.s32.totalorder %s49, %s50
      %p59 = scmp.eq.s32.totalorder %s18, 0
      %p60 = por %p58, %p59
      %p61 = scmp.ne.s32.totalorder %s49, %s50
      %p62 = scmp.eq.s32.totalorder %s19, 1
      %p63 = por %p61, %p62
      %p65 = scmp.ne.s32.totalorder %s50, %s64
      %p66 = scmp.eq.s32.totalorder %s19, 0
      %p67 = por %p65, %p66
      %s68 = ssub.s32 %s13, %s20
      %p69 = scmp.eq.s32.totalorder %s68, 0
      %s71 = sadd.s32 %s70, 1
      %s72 = scalar_select %p69, %s70, %s71
      %p75 = pneg %p69
      %p76 = scmp.eq.s32.totalorder %s13, 1
      %p77 = por %p75, %p76
      %p78 = scmp.ne.s32.totalorder %s70, %s73
      %p79 = scmp.eq.s32.totalorder %s13, 0
      %p80 = por %p78, %p79
      %p81 = scmp.ne.s32.totalorder %s70, %s73
      %p82 = scmp.eq.s32.totalorder %s18, 1
      %p83 = por %p81, %p82
      %p84 = scmp.ne.s32.totalorder %s73, %s74
      %p85 = scmp.eq.s32.totalorder %s18, 0
      %p86 = por %p84, %p85
      %p87 = scmp.ne.s32.totalorder %s73, %s74
      %p88 = scmp.eq.s32.totalorder %s19, 1
      %p89 = por %p87, %p88
      %p91 = scmp.ne.s32.totalorder %s74, %s90
      %p92 = scmp.eq.s32.totalorder %s19, 0
      %p93 = por %p91, %p92
      %s94 = ssub.s32 %s13, %s20
      %p95 = scmp.eq.s32.totalorder %s94, 0
      %s97 = sadd.s32 %s96, 1
      %s98 = scalar_select %p95, %s96, %s97
      %p101 = pneg %p95
      %p102 = scmp.eq.s32.totalorder %s13, 1
      %p103 = por %p101, %p102
      %p104 = scmp.ne.s32.totalorder %s96, %s99
      %p105 = scmp.eq.s32.totalorder %s13, 0
      %p106 = por %p104, %p105
      %p107 = scmp.ne.s32.totalorder %s96, %s99
      %p108 = scmp.eq.s32.totalorder %s18, 1
      %p109 = por %p107, %p108
      %p110 = scmp.ne.s32.totalorder %s99, %s100
      %p111 = scmp.eq.s32.totalorder %s18, 0
      %p112 = por %p110, %p111
      %p113 = scmp.ne.s32.totalorder %s99, %s100
      %p114 = scmp.eq.s32.totalorder %s19, 1
      %p115 = por %p113, %p114
      %p117 = scmp.ne.s32.totalorder %s100, %s116
      %p118 = scmp.eq.s32.totalorder %s19, 0
      %p119 = por %p117, %p118
      %p120 = scmp.le.s32.totalorder 1, %s13
      %p121 = scmp.lt.s32.totalorder %s13, 3
      %p122 = pnand %p120, %p121
      %p123 = pneg %p122
      // Predicated region
      $region9: #{tpu_custom_call.1} parent=5 // pred_check
        _
      $region10: #{tpu_custom_call.1} parent=5 // pred_check_branch
        %125 = sbr.rel (%p122) target = $region12
      $region11: #{tpu_custom_call.1} parent=5 // pred_region
        %s126 = ssub.s32 %s13, 1
        // Predicated region
        $region13: #{tpu_custom_call.1} parent=11 // pred_check
          %p127 = pneg %p60
        $region14: #{tpu_custom_call.1} parent=11 // pred_check_branch
          %129 = sbr.rel (%p127) target = $region16
        $region15: #{tpu_custom_call.1} parent=11 // pred_region
          %131 = vsyncadd [#allocation3], 0
          %s132 = sshll.u32 %s1, 4
          %s133 = int_to_ptr.hbm [resolvable:$true] %s132
          %s134 = sshll.u32 [#allocation2], 4
          %s135 = int_to_ptr.vmem [resolvable:$true] %s134
          %140 = dma.hbm_to_vmem [thread:$0]  %s133, 256, %s135, [#allocation3], 64, 64, 4
        $region16: #{tpu_custom_call.1} parent=11 // pred_fallthru
          _
      $region12: #{tpu_custom_call.1} parent=5 // pred_fallthru
        _
      %p141 = scmp.lt.s32.totalorder %s13, 2
      // Predicated region
      $region17: #{tpu_custom_call.1} parent=5 // pred_check
        %p142 = pneg %p141
      $region18: #{tpu_custom_call.1} parent=5 // pred_check_branch
        %144 = sbr.rel (%p142) target = $region20
      $region19: #{tpu_custom_call.1} parent=5 // pred_region
        // Predicated region
        $region21: #{tpu_custom_call.1} parent=19 // pred_check
          %p145 = pneg %p33
        $region22: #{tpu_custom_call.1} parent=19 // pred_check_branch
          %147 = sbr.rel (%p145) target = $region24
        $region23: #{tpu_custom_call.1} parent=19 // pred_region
          %p148 = scmp.lt.s32.totalorder %s13, 1
          %s149 = scalar_select %p148, %s13, 1
          %s150 = scalar_lea.vmem %s0, %s149
        $region24: #{tpu_custom_call.1} parent=19 // pred_fallthru
          _
        // Predicated region
        $region25: #{tpu_custom_call.1} parent=19 // pred_check
          %p151 = pneg %p80
        $region26: #{tpu_custom_call.1} parent=19 // pred_check_branch
          %153 = sbr.rel (%p151) target = $region28
        $region27: #{tpu_custom_call.1} parent=19 // pred_region
          %p154 = scmp.lt.s32.totalorder %s13, 1
          %s155 = scalar_select %p154, %s13, 1
          %s156 = smul.addr %s155, 4
          %s157 = scalar_lea.vmem %s2, %s156
        $region28: #{tpu_custom_call.1} parent=19 // pred_fallthru
          _
      $region20: #{tpu_custom_call.1} parent=5 // pred_fallthru
        _
      %p158 = scmp.le.s32.totalorder 1, %s13
      %p159 = scmp.lt.s32.totalorder %s13, 3
      %p160 = pnand %p158, %p159
      %p161 = pneg %p160
      // Predicated region
      $region29: #{tpu_custom_call.1} parent=5 // pred_check
        _
      $region30: #{tpu_custom_call.1} parent=5 // pred_check_branch
        %163 = sbr.rel (%p160) target = $region32
      $region31: #{tpu_custom_call.1} parent=5 // pred_region
        %s164 = ssub.s32 %s13, 1
        // Predicated region
        $region33: #{tpu_custom_call.1} parent=31 // pred_check
          %p165 = pneg %p60
        $region34: #{tpu_custom_call.1} parent=31 // pred_check_branch
          %167 = sbr.rel (%p165) target = $region36
        $region35: #{tpu_custom_call.1} parent=31 // pred_region
          %169 = dma.done [#allocation3], 256
        $region36: #{tpu_custom_call.1} parent=31 // pred_fallthru
          _
        %p170 = scmp.lt.s32.totalorder %s18, 1
        %s171 = scalar_select %p170, %s18, 1
        %s172 = scalar_lea.vmem %s0, %s171
        %p173 = pneg %p39
        %p174 = pneg %p36
        %p175 = pneg %p60
        %p176 = pneg %p57
        %p177 = scmp.lt.s32.totalorder %s18, 1
        %s178 = scalar_select %p177, %s18, 1
        %s179 = smul.addr %s178, 4
        %s180 = scalar_lea.vmem %s2, %s179
        %p181 = pneg %p86
        %p182 = pneg %p83
        %p183 = pneg %p112
        %p184 = pneg %p109
        %s185 = sand.u32 %s99, 1
        %s186 = scalar_lea.sflag [#allocation4], %s185
        %s187 = sand.u32 %s99, 1
        %s188 = smul.addr %s187, 32
        %s189 = scalar_lea.vmem [#allocation5], %s188
        %p190 = scmp.lt.s32.totalorder %s18, 1
        %s191 = scalar_select %p190, %s18, 1
        %s192 = scalar_lea.vmem %s0, %s191
        %p193 = scmp.lt.s32.totalorder %s18, 1
        %s194 = scalar_select %p193, %s18, 1
        %s195 = smul.addr %s194, 4
        %s196 = scalar_lea.vmem %s2, %s195
        %v197 = vld [vmem:[%s192] sm:$0x1]
        %v198 = vld [vmem:[%s196] sm:$0x7]
        %v199 = vld [vmem:[#allocation2] sm:$0xf]
        %v200 = vld [vmem:[#allocation2 + $0x4] sm:$0xf]
        %v201 = vld [vmem:[#allocation2 + $0x8] sm:$0xf]
        %v202 = vld [vmem:[#allocation2 + $0xc] sm:$0xf]
        %v207 = vrot.slane %v199, 7
        %v208 = vrot.slane %v200, 7
        %v209 = vrot.slane %v201, 7
        %v210 = vrot.slane %v202, 7
        %v216 = vrot.slane %v198, 3
        %vm218 = vcmask 1040384
        %v219 = vsel %vm218, %v197, %v207
        %v220 = vsel %vm218, %v197, %v208
        %v221 = vsel %vm218, %v197, %v209
        %v222 = vsel %vm218, %v197, %v210
        %vm223 = vcmask 1044480
        %v224 = vsel %vm223, %v219, %v216
        %v225 = vsel %vm223, %v220, %v216
        %v226 = vsel %vm223, %v221, %v216
        %v227 = vsel %vm223, %v222, %v216
        %228 = vst [vmem:[%s189] sm:$0xff] %v224
        %229 = vst [vmem:[%s189 + $0x8] sm:$0xff] %v225
        %230 = vst [vmem:[%s189 + $0x10] sm:$0xff] %v226
        %231 = vst [vmem:[%s189 + $0x18] sm:$0xff] %v227
        %s232 = sand.u32 %s99, 1
        %s233 = scalar_lea.sflag [#allocation4], %s232
        %s234 = sand.u32 %s99, 1
        %s235 = smul.addr %s234, 32
        %s236 = scalar_lea.vmem [#allocation5], %s235
        // Predicated region
        $region37: #{tpu_custom_call.1} parent=31 // pred_check
          %p237 = pneg %p109
        $region38: #{tpu_custom_call.1} parent=31 // pred_check_branch
          %239 = sbr.rel (%p237) target = $region40
        $region39: #{tpu_custom_call.1} parent=31 // pred_region
          %241 = vsyncadd %s233, 0
          %s242 = smul.addr %s18, 4
          %s243 = smul.addr %s242, 8
          %s244 = scalar_lea.hbm %s3, %s243
          %s245 = sshll.u32 %s236, 4
          %s246 = int_to_ptr.vmem [resolvable:$true] %s245
          %s247 = sshll.u32 %s244, 4
          %s248 = int_to_ptr.hbm [resolvable:$true] %s247
          %253 = dma.vmem_to_hbm [thread:$0]  %s246, 512, %s248, %s233, 128, 128, 8
        $region40: #{tpu_custom_call.1} parent=31 // pred_fallthru
          _
      $region32: #{tpu_custom_call.1} parent=5 // pred_fallthru
        _
      %p254 = scmp.le.s32.totalorder 2, %s13
      // Predicated region
      $region41: #{tpu_custom_call.1} parent=5 // pred_check
        %p255 = pneg %p254
      $region42: #{tpu_custom_call.1} parent=5 // pred_check_branch
        %257 = sbr.rel (%p255) target = $region44
      $region43: #{tpu_custom_call.1} parent=5 // pred_region
        %s258 = ssub.s32 %s13, 2
        // Predicated region
        $region45: #{tpu_custom_call.1} parent=43 // pred_check
          %p259 = pneg %p115
        $region46: #{tpu_custom_call.1} parent=43 // pred_check_branch
          %261 = sbr.rel (%p259) target = $region48
        $region47: #{tpu_custom_call.1} parent=43 // pred_region
          %s262 = sand.u32 %s100, 1
          %s263 = scalar_lea.sflag [#allocation4], %s262
          %s264 = sand.u32 %s100, 1
          %s265 = smul.addr %s264, 32
          %s266 = scalar_lea.vmem [#allocation5], %s265
          %268 = dma.done %s263, 512
        $region48: #{tpu_custom_call.1} parent=43 // pred_fallthru
          _
      $region44: #{tpu_custom_call.1} parent=5 // pred_fallthru
        _
    $region6: #{tpu_custom_call.1} parent=1 // loop_footer
      %s17 = sadd.s32 1, %s13
    $region7: #{tpu_custom_call.1} parent=1 // loop_footer_branch
      %12 = sbr.rel target = $region3
    $region8: #{tpu_custom_call.1} parent=1 // loop_exit
      _
    %269 = vsyncpa [#allocation3], 1
    %s270 = scalar_lea.sflag [#allocation3], 1
    %271 = vsyncpa %s270, 1
    %272 = vsyncpa [#allocation4], 1
    %s273 = scalar_lea.sflag [#allocation4], 1
    %274 = vsyncpa %s273, 1

</llo_original>
